<compile_context>
chip_gen: v7x
topology: tpu7x:2x2x1
jax: 0.10.0
libtpu: 0.0.40
codegen_flags: <defaults>
</compile_context>

<pallas_src>
import jax
import jax.numpy as jnp
from jax.experimental import pallas as pl
from jax.experimental.pallas import tpu as pltpu

HIDDEN = 256       # fixed by the module definition
TM_MAX = 1024      # max batch-tile rows (safe for v7x's 64 MiB / 32 MiB scoped VMEM)


def _critic_kernel(s_ref, a_ref,
                   w1c_ref, b1c_ref,     # (S, 512), (1, 512)   [head0 | head1] on lanes
                   w2hs_ref,             # (2, 256, 256)         stacked hidden weights
                   w2ac_ref, b2c_ref,    # (A, 512), (1, 512)
                   w3c_ref, b3c_ref,     # (2, 256), (1, 2)
                   q_ref):               # (tm, 2): [:,0]=q1, [:,1]=q2
    s = s_ref[...]
    a = a_ref[...]

    # Fused layer-1 for BOTH heads: one (tm, S) x (S, 512) matmul on the MXU.
    h = jnp.dot(s, w1c_ref[...], preferred_element_type=jnp.float32) + b1c_ref[...]
    h = jnp.maximum(h, 0.0)

    # Fused "action" path of layer-2 for BOTH heads: one (tm, A) x (A, 512) matmul.
    za = jnp.dot(a, w2ac_ref[...], preferred_element_type=jnp.float32)

    def head(i):
        lo, hi = i * HIDDEN, (i + 1) * HIDDEN
        # layer2[0]: Linear(256 + A, 256) on cat([h_i, a], 1), + ReLU
        z = (jnp.dot(h[:, lo:hi], w2hs_ref[i], preferred_element_type=jnp.float32)
             + za[:, lo:hi] + b2c_ref[:, lo:hi])
        z = jnp.maximum(z, 0.0)
        # layer2[2]: Linear(256, 1) done off the MXU: VPU multiply + lane reduction.
        return jnp.sum(z * w3c_ref[i:i + 1, :], axis=-1, keepdims=True)

    q_ref[:, 0:1] = head(0) + b3c_ref[:, 0:1]
    q_ref[:, 1:2] = head(1) + b3c_ref[:, 1:2]


@jax.jit
def critic_forward(s, a, params):
    """params: packed dict from pack_critic_params(). Returns (q1, q2), each (B, 1)."""
    batch, state_dim = s.shape
    action_dim = a.shape[1]

    tm = batch if batch <= TM_MAX else TM_MAX
    grid = (pl.cdiv(batch, tm),)

    # Advisory cost for XLA's scheduler (MXU flops + dominant byte traffic).
    flops = 2 * batch * (state_dim * 2 * HIDDEN
                         + action_dim * 2 * HIDDEN
                         + 2 * HIDDEN * HIDDEN
                         + 2 * HIDDEN)
    param_bytes = 4 * (state_dim * 2 * HIDDEN + 2 * HIDDEN
                       + 2 * HIDDEN * HIDDEN
                       + action_dim * 2 * HIDDEN + 2 * HIDDEN
                       + 2 * HIDDEN + 2)
    bytes_accessed = param_bytes + 4 * batch * (state_dim + action_dim + 2)

    q = pl.pallas_call(
        _critic_kernel,
        out_shape=jax.ShapeDtypeStruct((batch, 2), jnp.float32),
        grid_spec=pltpu.PrefetchScalarGridSpec(
            num_scalar_prefetch=0,
            grid=grid,
            in_specs=[
                # activations: tiled over the batch grid
                pl.BlockSpec((tm, state_dim), lambda i: (i, 0)),
                pl.BlockSpec((tm, action_dim), lambda i: (i, 0)),
                # packed parameters: constant index_map -> stay VMEM-resident
                pl.BlockSpec((state_dim, 2 * HIDDEN), lambda i: (0, 0)),
                pl.BlockSpec((1, 2 * HIDDEN), lambda i: (0, 0)),
                pl.BlockSpec((2, HIDDEN, HIDDEN), lambda i: (0, 0, 0)),
                pl.BlockSpec((action_dim, 2 * HIDDEN), lambda i: (0, 0)),
                pl.BlockSpec((1, 2 * HIDDEN), lambda i: (0, 0)),
                pl.BlockSpec((2, HIDDEN), lambda i: (0, 0)),
                pl.BlockSpec((1, 2), lambda i: (0, 0)),
            ],
            out_specs=pl.BlockSpec((tm, 2), lambda i: (i, 0)),
        ),
        compiler_params=pltpu.CompilerParams(
            dimension_semantics=("parallel",)),
        cost_estimate=pl.CostEstimate(
            flops=flops, transcendentals=0, bytes_accessed=bytes_accessed),
    )(
        s, a,
        params["w1c"], params["b1c"], params["w2hs"],
        params["w2ac"], params["b2c"], params["w3c"], params["b3c"],
    )
    return q[:, 0:1], q[:, 1:2]


def _linear_init(key, in_features, out_features):
    """PyTorch-style nn.Linear init: U(-1/sqrt(fan_in), 1/sqrt(fan_in)).

    W is stored as (in_features, out_features) (transpose of torch layout), b as (1, out).
    """
    kw, kb = jax.random.split(key)
    bound = 1.0 / jnp.sqrt(jnp.float32(in_features))
    w = jax.random.uniform(kw, (in_features, out_features), jnp.float32,
                           minval=-bound, maxval=bound)
    b = jax.random.uniform(kb, (1, out_features), jnp.float32,
                           minval=-bound, maxval=bound)
    return w, b


def init_critic_raw(key, state_dim, action_dim):
    """Per-layer parameters exactly mirroring the PyTorch module."""
    keys = jax.random.split(key, 6)
    w1, b1 = _linear_init(keys[0], state_dim, HIDDEN)
    w2, b2 = _linear_init(keys[1], HIDDEN + action_dim, HIDDEN)
    w3, b3 = _linear_init(keys[2], HIDDEN, 1)
    w1_, b1_ = _linear_init(keys[3], state_dim, HIDDEN)
    w2_, b2_ = _linear_init(keys[4], HIDDEN + action_dim, HIDDEN)
    w3_, b3_ = _linear_init(keys[5], HIDDEN, 1)
    return dict(w1=w1, b1=b1, w2=w2, b2=b2, w3=w3, b3=b3,
                w1_=w1_, b1_=b1_, w2_=w2_, b2_=b2_, w3_=w3_, b3_=b3_)


def pack_critic_params(raw):
    """One-time packing of the 12 per-layer arrays into 7 fused, lane-dense arrays."""
    return {
        "w1c":  jnp.concatenate([raw["w1"], raw["w1_"]], axis=1),              # (S, 512)
        "b1c":  jnp.concatenate([raw["b1"], raw["b1_"]], axis=1),              # (1, 512)
        "w2hs": jnp.stack([raw["w2"][:HIDDEN], raw["w2_"][:HIDDEN]], axis=0),  # (2, 256, 256)
        "w2ac": jnp.concatenate([raw["w2"][HIDDEN:], raw["w2_"][HIDDEN:]], axis=1),  # (A, 512)
        "b2c":  jnp.concatenate([raw["b2"], raw["b2_"]], axis=1),              # (1, 512)
        "w3c":  jnp.stack([raw["w3"][:, 0], raw["w3_"][:, 0]], axis=0),        # (2, 256)
        "b3c":  jnp.concatenate([raw["b3"], raw["b3_"]], axis=1),              # (1, 2)
    }


def critic_forward_ref(s, a, raw):
    """Pure-JAX reference mirroring the PyTorch forward exactly."""
    def q_head(w1, b1, w2, b2, w3, b3):
        h = jnp.maximum(s @ w1 + b1, 0.0)
        x = jnp.concatenate([h, a], axis=1)
        z = jnp.maximum(x @ w2 + b2, 0.0)
        return z @ w3 + b3
    q1 = q_head(raw["w1"], raw["b1"], raw["w2"], raw["b2"], raw["w3"], raw["b3"])
    q2 = q_head(raw["w1_"], raw["b1_"], raw["w2_"], raw["b2_"], raw["w3_"], raw["b3_"])
    return q1, q2


if __name__ == "__main__":
    batch = 8
    state_dim = 16
    action_dim = 4

    key = jax.random.PRNGKey(0)
    k_s, k_a, k_p = jax.random.split(key, 3)

    s = jax.random.normal(k_s, (batch, state_dim), jnp.float32)
    a = jax.random.normal(k_a, (batch, action_dim), jnp.float32)

    raw = init_critic_raw(k_p, state_dim, action_dim)
    packed = pack_critic_params(raw)

    q1, q2 = critic_forward(s, a, packed)
    jax.block_until_ready((q1, q2))

    q1_ref, q2_ref = critic_forward_ref(s, a, raw)
    assert q1.shape == (batch, 1) and q2.shape == (batch, 1)
    assert jnp.allclose(q1, q1_ref, atol=1e-4, rtol=1e-4)
    assert jnp.allclose(q2, q2_ref, atol=1e-4, rtol=1e-4)

    print("KERNEL_OK")
</pallas_src>

<mosaic_0001>
module attributes {stable_mosaic.version = 11 : i64} {
  func.func @_critic_kernel(%arg0: i32, %arg1: memref<8x16xf32, #tpu.memory_space<vmem>>, %arg2: memref<8x4xf32, #tpu.memory_space<vmem>>, %arg3: memref<16x512xf32, #tpu.memory_space<vmem>>, %arg4: memref<1x512xf32, #tpu.memory_space<vmem>>, %arg5: memref<2x256x256xf32, #tpu.memory_space<vmem>>, %arg6: memref<4x512xf32, #tpu.memory_space<vmem>>, %arg7: memref<1x512xf32, #tpu.memory_space<vmem>>, %arg8: memref<2x256xf32, #tpu.memory_space<vmem>>, %arg9: memref<1x2xf32, #tpu.memory_space<vmem>>, %arg10: memref<8x2xf32, #tpu.memory_space<vmem>>) attributes {dimension_semantics = [#tpu.dimension_semantics<parallel>], iteration_bounds = array<i64: 1>, scalar_prefetch = 0 : i64, scratch_operands = 0 : i64, tpu.core_type = #tpu.core_type<tc>, window_params = [{transform_indices = @transform_0, window_bounds = array<i64: 8, 16>}, {transform_indices = @transform_1, window_bounds = array<i64: 8, 4>}, {pipeline_mode = #tpu.pipeline_mode<synchronous>, transform_indices = @transform_2, window_bounds = array<i64: 16, 512>}, {pipeline_mode = #tpu.pipeline_mode<synchronous>, transform_indices = @transform_3, window_bounds = array<i64: 1, 512>}, {pipeline_mode = #tpu.pipeline_mode<synchronous>, transform_indices = @transform_4, window_bounds = array<i64: 2, 256, 256>}, {pipeline_mode = #tpu.pipeline_mode<synchronous>, transform_indices = @transform_5, window_bounds = array<i64: 4, 512>}, {pipeline_mode = #tpu.pipeline_mode<synchronous>, transform_indices = @transform_6, window_bounds = array<i64: 1, 512>}, {pipeline_mode = #tpu.pipeline_mode<synchronous>, transform_indices = @transform_7, window_bounds = array<i64: 2, 256>}, {pipeline_mode = #tpu.pipeline_mode<synchronous>, transform_indices = @transform_8, window_bounds = array<i64: 1, 2>}, {transform_indices = @transform_9, window_bounds = array<i64: 8, 2>}]} {
    %c0 = arith.constant 0 : index
    %c0_0 = arith.constant 0 : index
    %0 = vector.load %arg1[%c0, %c0_0] : memref<8x16xf32, #tpu.memory_space<vmem>>, vector<8x16xf32>
    %c0_1 = arith.constant 0 : index
    %c0_2 = arith.constant 0 : index
    %1 = vector.load %arg2[%c0_1, %c0_2] : memref<8x4xf32, #tpu.memory_space<vmem>>, vector<8x4xf32>
    %c0_3 = arith.constant 0 : index
    %c0_4 = arith.constant 0 : index
    %2 = vector.load %arg3[%c0_3, %c0_4] : memref<16x512xf32, #tpu.memory_space<vmem>>, vector<16x512xf32>
    %cst = arith.constant dense<0.000000e+00> : vector<8x512xf32>
    %3 = tpu.matmul %0, %2, %cst {dimension_numbers = #tpu.dot_dimension_numbers<[1], [0], [0], [1], [0, 0, 1, 1], [], []>} : vector<8x16xf32>, vector<16x512xf32>, vector<8x512xf32> -> vector<8x512xf32>
    %c0_5 = arith.constant 0 : index
    %c0_6 = arith.constant 0 : index
    %4 = vector.load %arg4[%c0_5, %c0_6] : memref<1x512xf32, #tpu.memory_space<vmem>>, vector<1x512xf32>
    %5 = vector.broadcast %4 : vector<1x512xf32> to vector<8x512xf32>
    %6 = arith.addf %3, %5 : vector<8x512xf32>
    %cst_7 = arith.constant 0.000000e+00 : f32
    %7 = vector.broadcast %cst_7 : f32 to vector<8x512xf32>
    %8 = arith.maximumf %6, %7 : vector<8x512xf32>
    %c0_8 = arith.constant 0 : index
    %c0_9 = arith.constant 0 : index
    %9 = vector.load %arg6[%c0_8, %c0_9] : memref<4x512xf32, #tpu.memory_space<vmem>>, vector<4x512xf32>
    %cst_10 = arith.constant dense<0.000000e+00> : vector<8x512xf32>
    %10 = tpu.matmul %1, %9, %cst_10 {dimension_numbers = #tpu.dot_dimension_numbers<[1], [0], [0], [1], [0, 0, 1, 1], [], []>} : vector<8x4xf32>, vector<4x512xf32>, vector<8x512xf32> -> vector<8x512xf32>
    %11 = vector.extract_strided_slice %8 {offsets = [0, 0], sizes = [8, 256], strides = [1, 1]} : vector<8x512xf32> to vector<8x256xf32>
    %c0_11 = arith.constant 0 : index
    %c0_12 = arith.constant 0 : index
    %c0_13 = arith.constant 0 : index
    %12 = vector.load %arg5[%c0_11, %c0_12, %c0_13] : memref<2x256x256xf32, #tpu.memory_space<vmem>>, vector<1x256x256xf32>
    %13 = vector.shape_cast %12 : vector<1x256x256xf32> to vector<256x256xf32>
    %cst_14 = arith.constant dense<0.000000e+00> : vector<8x256xf32>
    %14 = tpu.matmul %11, %13, %cst_14 {dimension_numbers = #tpu.dot_dimension_numbers<[1], [0], [0], [1], [0, 0, 1, 1], [], []>} : vector<8x256xf32>, vector<256x256xf32>, vector<8x256xf32> -> vector<8x256xf32>
    %15 = vector.extract_strided_slice %10 {offsets = [0, 0], sizes = [8, 256], strides = [1, 1]} : vector<8x512xf32> to vector<8x256xf32>
    %16 = arith.addf %14, %15 : vector<8x256xf32>
    %c0_15 = arith.constant 0 : index
    %c0_16 = arith.constant 0 : index
    %17 = vector.load %arg7[%c0_15, %c0_16] : memref<1x512xf32, #tpu.memory_space<vmem>>, vector<1x256xf32>
    %18 = vector.broadcast %17 : vector<1x256xf32> to vector<8x256xf32>
    %19 = arith.addf %16, %18 : vector<8x256xf32>
    %cst_17 = arith.constant 0.000000e+00 : f32
    %20 = vector.broadcast %cst_17 : f32 to vector<8x256xf32>
    %21 = arith.maximumf %19, %20 : vector<8x256xf32>
    %c0_18 = arith.constant 0 : index
    %c0_19 = arith.constant 0 : index
    %22 = vector.load %arg8[%c0_18, %c0_19] : memref<2x256xf32, #tpu.memory_space<vmem>>, vector<1x256xf32>
    %23 = vector.broadcast %22 : vector<1x256xf32> to vector<8x256xf32>
    %24 = arith.mulf %21, %23 : vector<8x256xf32>
    %cst_20 = arith.constant dense<0.000000e+00> : vector<8xf32>
    %25 = vector.multi_reduction <add>, %24, %cst_20 [1] : vector<8x256xf32> to vector<8xf32>
    %26 = vector.shape_cast %25 : vector<8xf32> to vector<8x1xf32>
    %c0_21 = arith.constant 0 : index
    %c0_22 = arith.constant 0 : index
    %27 = vector.load %arg9[%c0_21, %c0_22] : memref<1x2xf32, #tpu.memory_space<vmem>>, vector<1x1xf32>
    %28 = vector.broadcast %27 : vector<1x1xf32> to vector<8x1xf32>
    %29 = arith.addf %26, %28 : vector<8x1xf32>
    %c0_23 = arith.constant 0 : index
    %c0_24 = arith.constant 0 : index
    %30 = vector.load %arg10[%c0_23, %c0_24] : memref<8x2xf32, #tpu.memory_space<vmem>>, vector<8x1xf32>
    tpu.vector_store %arg10[%c0_23, %c0_24], %29 {strides = array<i32>} : memref<8x2xf32, #tpu.memory_space<vmem>>, vector<8x1xf32>,
    %31 = vector.extract_strided_slice %8 {offsets = [0, 256], sizes = [8, 256], strides = [1, 1]} : vector<8x512xf32> to vector<8x256xf32>
    %c1 = arith.constant 1 : index
    %c0_25 = arith.constant 0 : index
    %c0_26 = arith.constant 0 : index
    %32 = vector.load %arg5[%c1, %c0_25, %c0_26] : memref<2x256x256xf32, #tpu.memory_space<vmem>>, vector<1x256x256xf32>
    %33 = vector.shape_cast %32 : vector<1x256x256xf32> to vector<256x256xf32>
    %cst_27 = arith.constant dense<0.000000e+00> : vector<8x256xf32>
    %34 = tpu.matmul %31, %33, %cst_27 {dimension_numbers = #tpu.dot_dimension_numbers<[1], [0], [0], [1], [0, 0, 1, 1], [], []>} : vector<8x256xf32>, vector<256x256xf32>, vector<8x256xf32> -> vector<8x256xf32>
    %35 = vector.extract_strided_slice %10 {offsets = [0, 256], sizes = [8, 256], strides = [1, 1]} : vector<8x512xf32> to vector<8x256xf32>
    %36 = arith.addf %34, %35 : vector<8x256xf32>
    %c0_28 = arith.constant 0 : index
    %c256 = arith.constant 256 : index
    %37 = vector.load %arg7[%c0_28, %c256] : memref<1x512xf32, #tpu.memory_space<vmem>>, vector<1x256xf32>
    %38 = vector.broadcast %37 : vector<1x256xf32> to vector<8x256xf32>
    %39 = arith.addf %36, %38 : vector<8x256xf32>
    %cst_29 = arith.constant 0.000000e+00 : f32
    %40 = vector.broadcast %cst_29 : f32 to vector<8x256xf32>
    %41 = arith.maximumf %39, %40 : vector<8x256xf32>
    %c1_30 = arith.constant 1 : index
    %c0_31 = arith.constant 0 : index
    %42 = vector.load %arg8[%c1_30, %c0_31] : memref<2x256xf32, #tpu.memory_space<vmem>>, vector<1x256xf32>
    %43 = vector.broadcast %42 : vector<1x256xf32> to vector<8x256xf32>
    %44 = arith.mulf %41, %43 : vector<8x256xf32>
    %cst_32 = arith.constant dense<0.000000e+00> : vector<8xf32>
    %45 = vector.multi_reduction <add>, %44, %cst_32 [1] : vector<8x256xf32> to vector<8xf32>
    %46 = vector.shape_cast %45 : vector<8xf32> to vector<8x1xf32>
    %c0_33 = arith.constant 0 : index
    %c1_34 = arith.constant 1 : index
    %47 = vector.load %arg9[%c0_33, %c1_34] : memref<1x2xf32, #tpu.memory_space<vmem>>, vector<1x1xf32>
    %48 = vector.broadcast %47 : vector<1x1xf32> to vector<8x1xf32>
    %49 = arith.addf %46, %48 : vector<8x1xf32>
    %c0_35 = arith.constant 0 : index
    %c1_36 = arith.constant 1 : index
    %50 = vector.load %arg10[%c0_35, %c1_36] : memref<8x2xf32, #tpu.memory_space<vmem>>, vector<8x1xf32>
    tpu.vector_store %arg10[%c0_35, %c1_36], %49 {strides = array<i32>} : memref<8x2xf32, #tpu.memory_space<vmem>>, vector<8x1xf32>,
    return
  }
  func.func @transform_0(%arg0: i32) -> (i32, i32) {
    %c0_i32 = arith.constant 0 : i32
    %c0_i32_0 = arith.constant 0 : i32
    return %arg0, %c0_i32 : i32, i32
  }
  func.func @transform_1(%arg0: i32) -> (i32, i32) {
    %c0_i32 = arith.constant 0 : i32
    %c0_i32_0 = arith.constant 0 : i32
    return %arg0, %c0_i32 : i32, i32
  }
  func.func @transform_2(%arg0: i32) -> (i32, i32) {
    %c0_i32 = arith.constant 0 : i32
    %c0_i32_0 = arith.constant 0 : i32
    %c0_i32_1 = arith.constant 0 : i32
    return %c0_i32, %c0_i32_0 : i32, i32
  }
  func.func @transform_3(%arg0: i32) -> (i32, i32) {
    %c0_i32 = arith.constant 0 : i32
    %c0_i32_0 = arith.constant 0 : i32
    %c0_i32_1 = arith.constant 0 : i32
    return %c0_i32, %c0_i32_0 : i32, i32
  }
  func.func @transform_4(%arg0: i32) -> (i32, i32, i32) {
    %c0_i32 = arith.constant 0 : i32
    %c0_i32_0 = arith.constant 0 : i32
    %c0_i32_1 = arith.constant 0 : i32
    %c0_i32_2 = arith.constant 0 : i32
    return %c0_i32, %c0_i32_0, %c0_i32_1 : i32, i32, i32
  }
  func.func @transform_5(%arg0: i32) -> (i32, i32) {
    %c0_i32 = arith.constant 0 : i32
    %c0_i32_0 = arith.constant 0 : i32
    %c0_i32_1 = arith.constant 0 : i32
    return %c0_i32, %c0_i32_0 : i32, i32
  }
  func.func @transform_6(%arg0: i32) -> (i32, i32) {
    %c0_i32 = arith.constant 0 : i32
    %c0_i32_0 = arith.constant 0 : i32
    %c0_i32_1 = arith.constant 0 : i32
    return %c0_i32, %c0_i32_0 : i32, i32
  }
  func.func @transform_7(%arg0: i32) -> (i32, i32) {
    %c0_i32 = arith.constant 0 : i32
    %c0_i32_0 = arith.constant 0 : i32
    %c0_i32_1 = arith.constant 0 : i32
    return %c0_i32, %c0_i32_0 : i32, i32
  }
  func.func @transform_8(%arg0: i32) -> (i32, i32) {
    %c0_i32 = arith.constant 0 : i32
    %c0_i32_0 = arith.constant 0 : i32
    %c0_i32_1 = arith.constant 0 : i32
    return %c0_i32, %c0_i32_0 : i32, i32
  }
  func.func @transform_9(%arg0: i32) -> (i32, i32) {
    %c0_i32 = arith.constant 0 : i32
    %c0_i32_0 = arith.constant 0 : i32
    return %arg0, %c0_i32 : i32, i32
  }
}

</mosaic_0001>

<llo_original>
// kernel: critic_forward.1
$region0: #{critic_forward.1}
  #allocation0 [shape = 'u32[]', space=smem, size = 0x4, offset = 0x4, fixed_abs, tag = 'smem constant byte address 0x4 - core index']
  #allocation1 [shape = 'u32[144,128]{1,0:T(1,128)}', space=vmem, size = 0x12000, scoped, tag = 'internal scratch']
  %s0 = inlined_call_operand.vmem [shape: f32[8,16], index: 0, kind: input, shape index: {}]
  %s1 = inlined_call_operand.vmem [shape: f32[8,4], index: 1, kind: input, shape index: {}]
  %s2 = inlined_call_operand.hbm [shape: f32[16,512], index: 2, kind: input, shape index: {}]
  %s3 = inlined_call_operand.vmem [shape: f32[1,512], index: 3, kind: input, shape index: {}]
  %s4 = inlined_call_operand.hbm [shape: f32[2,256,256], index: 4, kind: input, shape index: {}]
  %s5 = inlined_call_operand.vmem [shape: f32[4,512], index: 5, kind: input, shape index: {}]
  %s6 = inlined_call_operand.hbm [shape: f32[1,512], index: 6, kind: input, shape index: {}]
  %s7 = inlined_call_operand.vmem [shape: f32[2,256], index: 7, kind: input, shape index: {}]
  %s8 = inlined_call_operand.vmem [shape: f32[1,2], index: 8, kind: input, shape index: {}]
  %s9 = inlined_call_operand.vmem [shape: f32[8,2], index: 9, kind: output, shape index: {}]
  %s10 = sld [smem:[#allocation0]]
  $region58: #{critic_forward.1} parent=0
    _
  %s12 = ssub.s32 1, %s10
  %s13 = scalar_select 0, %s12, %s10
  $region1: #{critic_forward.1} parent=0
    #allocation2 [shape = 'u8[32768]{0}', space=vmem, size = 0x8000, scoped, tag = 'input window, operand 2, single buffered']
    #allocation3 [shape = 's32[1]{0}', space=sflag, size = 0x4, scoped, tag = 'scoped memory for critic_forward.1']
    #allocation4 [shape = 'u8[524288]{0}', space=vmem, size = 0x80000, scoped, tag = 'input window, operand 4, single buffered']
    #allocation5 [shape = 's32[1]{0}', space=sflag, size = 0x4, scoped, tag = 'scoped memory for critic_forward.1']
    #allocation6 [shape = 'u8[2048]{0}', space=vmem, size = 0x800, scoped, tag = 'input window, operand 6, single buffered']
    %14 = vsyncpa [#allocation3], 0
    %15 = vsyncpa [#allocation5], 0
    // Predicated region
    $region2: #{critic_forward.1} parent=1 // pred_check
      _
    $region3: #{critic_forward.1} parent=1 // pred_check_branch
      %17 = sbr.rel (0) target = $region5
    $region4: #{critic_forward.1} parent=1 // pred_region
      _
    $region5: #{critic_forward.1} parent=1 // pred_fallthru
      _
    // Predicated region
    $region6: #{critic_forward.1} parent=1 // pred_check
      _
    $region7: #{critic_forward.1} parent=1 // pred_check_branch
      %19 = sbr.rel (0) target = $region9
    $region8: #{critic_forward.1} parent=1 // pred_region
      _
    $region9: #{critic_forward.1} parent=1 // pred_fallthru
      _
    // Predicated region
    $region10: #{critic_forward.1} parent=1 // pred_check
      _
    $region11: #{critic_forward.1} parent=1 // pred_check_branch
      %21 = sbr.rel (0) target = $region13
    $region12: #{critic_forward.1} parent=1 // pred_region
      %s23 = ssub.s32 1024, 1024
      %24 = vsyncadd [#allocation3], %s23
      %s25 = sshll.u32 [#allocation2], 4
      %s26 = int_to_ptr.vmem [resolvable:$true] %s25
      %31 = dma.hbm_to_vmem [thread:$0]  %s2, 1024, %s26, [#allocation3], 512, 512, 32
    $region13: #{critic_forward.1} parent=1 // pred_fallthru
      _
    // Predicated region
    $region14: #{critic_forward.1} parent=1 // pred_check
      _
    $region15: #{critic_forward.1} parent=1 // pred_check_branch
      %33 = sbr.rel (0) target = $region17
    $region16: #{critic_forward.1} parent=1 // pred_region
      _
    $region17: #{critic_forward.1} parent=1 // pred_fallthru
      _
    // Predicated region
    $region18: #{critic_forward.1} parent=1 // pred_check
      _
    $region19: #{critic_forward.1} parent=1 // pred_check_branch
      %35 = sbr.rel (0) target = $region21
    $region20: #{critic_forward.1} parent=1 // pred_region
      %s37 = ssub.s32 16384, 16384
      %38 = vsyncadd [#allocation5], %s37
      %s39 = sshll.u32 [#allocation4], 4
      %s40 = int_to_ptr.vmem [resolvable:$true] %s39
      %45 = dma.hbm_to_vmem [thread:$0]  %s4, 16384, %s40, [#allocation5], 256, 256, 16
    $region21: #{critic_forward.1} parent=1 // pred_fallthru
      _
    // Predicated region
    $region22: #{critic_forward.1} parent=1 // pred_check
      _
    $region23: #{critic_forward.1} parent=1 // pred_check_branch
      %47 = sbr.rel (0) target = $region25
    $region24: #{critic_forward.1} parent=1 // pred_region
      _
    $region25: #{critic_forward.1} parent=1 // pred_fallthru
      _
    // Predicated region
    $region26: #{critic_forward.1} parent=1 // pred_check
      _
    $region27: #{critic_forward.1} parent=1 // pred_check_branch
      %49 = sbr.rel (0) target = $region29
    $region28: #{critic_forward.1} parent=1 // pred_region
      %s51 = ssub.s32 64, 64
      %52 = vsyncadd [#allocation5], %s51
      %s54 = sshll.u32 [#allocation6], 4
      %s55 = int_to_ptr.vmem [resolvable:$true] %s54
      %57 = dma.hbm_to_vmem [thread:$0]  %s6, 64, %s55, [#allocation5]
    $region29: #{critic_forward.1} parent=1 // pred_fallthru
      _
    // Predicated region
    $region30: #{critic_forward.1} parent=1 // pred_check
      _
    $region31: #{critic_forward.1} parent=1 // pred_check_branch
      %59 = sbr.rel (0) target = $region33
    $region32: #{critic_forward.1} parent=1 // pred_region
      _
    $region33: #{critic_forward.1} parent=1 // pred_fallthru
      _
    // Predicated region
    $region34: #{critic_forward.1} parent=1 // pred_check
      _
    $region35: #{critic_forward.1} parent=1 // pred_check_branch
      %61 = sbr.rel (0) target = $region37
    $region36: #{critic_forward.1} parent=1 // pred_region
      _
    $region37: #{critic_forward.1} parent=1 // pred_fallthru
      _
    // Predicated region
    $region38: #{critic_forward.1} parent=1 // pred_check
      _
    $region39: #{critic_forward.1} parent=1 // pred_check_branch
      %63 = sbr.rel (0) target = $region41
    $region40: #{critic_forward.1} parent=1 // pred_region
      %64 = dma.done [#allocation3], 1024
    $region41: #{critic_forward.1} parent=1 // pred_fallthru
      _
    // Predicated region
    $region42: #{critic_forward.1} parent=1 // pred_check
      _
    $region43: #{critic_forward.1} parent=1 // pred_check_branch
      %66 = sbr.rel (0) target = $region45
    $region44: #{critic_forward.1} parent=1 // pred_region
      %67 = dma.done [#allocation5], 16384
    $region45: #{critic_forward.1} parent=1 // pred_fallthru
      _
    // Predicated region
    $region46: #{critic_forward.1} parent=1 // pred_check
      _
    $region47: #{critic_forward.1} parent=1 // pred_check_branch
      %69 = sbr.rel (0) target = $region49
    $region48: #{critic_forward.1} parent=1 // pred_region
      %70 = dma.done [#allocation5], 64
    $region49: #{critic_forward.1} parent=1 // pred_fallthru
      _
    %v71 = vld [vmem:[%s0] sm:$0xff]
    %v72 = vld [vmem:[%s1] sm:$0xff]
    %v73 = vld [vmem:[#allocation2] sm:$0xff]
    %v74 = vld [vmem:[#allocation2 + $0x8] sm:$0xff]
    %v75 = vld [vmem:[#allocation2 + $0x10] sm:$0xff]
    %v76 = vld [vmem:[#allocation2 + $0x18] sm:$0xff]
    %v77 = vld [vmem:[#allocation2 + $0x20] sm:$0xff]
    %v78 = vld [vmem:[#allocation2 + $0x28] sm:$0xff]
    %v79 = vld [vmem:[#allocation2 + $0x30] sm:$0xff]
    %v80 = vld [vmem:[#allocation2 + $0x38] sm:$0xff]
    %v81 = vld [vmem:[%s3] sm:$0xf]
    %v83 = vlaneseq
    %v84 = vshrl.u32 %v83, 7
    %v85 = vsub.s32 0, %v84
    %v86 = vrot.slane %v81, %v85
    %v87 = vlaneseq
    %v88 = vshrl.u32 %v87, 7
    %v89 = vsub.s32 1, %v88
    %v90 = vrot.slane %v81, %v89
    %v91 = vlaneseq
    %v92 = vshrl.u32 %v91, 7
    %v93 = vsub.s32 2, %v92
    %v94 = vrot.slane %v81, %v93
    %v95 = vlaneseq
    %v96 = vshrl.u32 %v95, 7
    %v97 = vsub.s32 3, %v96
    %v98 = vrot.slane %v81, %v97
    %vm103 = vcmask 130048
    %v105 = vsel %vm103, %v71, 0
    %107 = vmatprep.subr.mxu0 %v74
    %108 = vmatpush1.msra.mxu0 %v73
    %109 = vmatprep.subr.mxu0 %v78
    %110 = vmatpush1.msra.mxu0 %v77
    %111 = vmatprep.subr.mxu0 0.0
    %112 = vmatpush1.msra.mxu0 0.0
    %113 = vmatprep.subr.mxu0 0.0
    %114 = vmatpush1.msra.mxu0 0.0
    %115 = vmatprep.subr.mxu0 0.0
    %116 = vmatpush1.msra.mxu0 0.0
    %117 = vmatprep.subr.mxu0 0.0
    %118 = vmatpush1.msra.mxu0 0.0
    %119 = vmatprep.subr.mxu0 0.0
    %120 = vmatpush1.msra.mxu0 0.0
    %121 = vmatprep.subr.mxu0 0.0
    %122 = vmatpush1.msra.mxu0 0.0
    %123 = vmatprep.subr.mxu0 0.0
    %124 = vmatpush1.msra.mxu0 0.0
    %125 = vmatprep.subr.mxu0 0.0
    %126 = vmatpush1.msra.mxu0 0.0
    %127 = vmatprep.subr.mxu0 0.0
    %128 = vmatpush1.msra.mxu0 0.0
    %129 = vmatprep.subr.mxu0 0.0
    %130 = vmatpush1.msra.mxu0 0.0
    %131 = vmatprep.subr.mxu0 0.0
    %132 = vmatpush1.msra.mxu0 0.0
    %133 = vmatprep.subr.mxu0 0.0
    %134 = vmatpush1.msra.mxu0 0.0
    %135 = vmatprep.subr.mxu0 0.0
    %136 = vmatpush1.msra.mxu0 0.0
    %137 = vmatprep.subr.mxu0 0.0
    %138 = vmatpush1.msra.mxu0 0.0
    %139 = vmatprep.subr.mxu0 0.0
    %140 = vmatpush1.msra.mxu0 0.0
    %141 = vmatprep.subr.mxu0 0.0
    %142 = vmatpush1.msra.mxu0 0.0
    %143 = vmatprep.subr.mxu0 0.0
    %144 = vmatpush1.msra.mxu0 0.0
    %145 = vmatprep.subr.mxu0 0.0
    %146 = vmatpush1.msra.mxu0 0.0
    %147 = vmatprep.subr.mxu0 0.0
    %148 = vmatpush1.msra.mxu0 0.0
    %149 = vmatprep.subr.mxu0 0.0
    %150 = vmatpush1.msra.mxu0 0.0
    %151 = vmatprep.subr.mxu0 0.0
    %152 = vmatpush1.msra.mxu0 0.0
    %153 = vmatprep.subr.mxu0 0.0
    %154 = vmatpush1.msra.mxu0 0.0
    %155 = vmatprep.subr.mxu0 0.0
    %156 = vmatpush1.msra.mxu0 0.0
    %157 = vmatprep.subr.mxu0 0.0
    %158 = vmatpush1.msra.mxu0 0.0
    %159 = vmatprep.subr.mxu0 0.0
    %160 = vmatpush1.msra.mxu0 0.0
    %161 = vmatprep.subr.mxu0 0.0
    %162 = vmatpush1.msra.mxu0 0.0
    %163 = vmatprep.subr.mxu0 0.0
    %164 = vmatpush1.msra.mxu0 0.0
    %165 = vmatprep.subr.mxu0 0.0
    %166 = vmatpush1.msra.mxu0 0.0
    %167 = vmatprep.subr.mxu0 0.0
    %168 = vmatpush1.msra.mxu0 0.0
    %169 = vmatprep.subr.mxu0 0.0
    %170 = vmatpush1.msra.mxu0 0.0
    %171 = vmatprep.mubr.f32.mxu0 0.0
    %172 = vmatmul.mubr.f32.gmra.mrb[0].mxu0 %v105
    %v173 = vpop.f32.mrb[0].mxu0
    %v174 = vadd.f32 %v86, %v173
    %v175 = vpop.f32.mrb[0].mxu0
    %v176 = vadd.f32 %v90, %v175
    %177 = vdwg.mxu0
    %178 = vmatprep.subr.mxu0 %v76
    %179 = vmatpush1.msra.mxu0 %v75
    %180 = vmatprep.subr.mxu0 %v80
    %181 = vmatpush1.msra.mxu0 %v79
    %182 = vmatprep.subr.mxu0 0.0
    %183 = vmatpush1.msra.mxu0 0.0
    %184 = vmatprep.subr.mxu0 0.0
    %185 = vmatpush1.msra.mxu0 0.0
    %186 = vmatprep.subr.mxu0 0.0
    %187 = vmatpush1.msra.mxu0 0.0
    %188 = vmatprep.subr.mxu0 0.0
    %189 = vmatpush1.msra.mxu0 0.0
    %190 = vmatprep.subr.mxu0 0.0
    %191 = vmatpush1.msra.mxu0 0.0
    %192 = vmatprep.subr.mxu0 0.0
    %193 = vmatpush1.msra.mxu0 0.0
    %194 = vmatprep.subr.mxu0 0.0
    %195 = vmatpush1.msra.mxu0 0.0
    %196 = vmatprep.subr.mxu0 0.0
    %197 = vmatpush1.msra.mxu0 0.0
    %198 = vmatprep.subr.mxu0 0.0
    %199 = vmatpush1.msra.mxu0 0.0
    %200 = vmatprep.subr.mxu0 0.0
    %201 = vmatpush1.msra.mxu0 0.0
    %202 = vmatprep.subr.mxu0 0.0
    %203 = vmatpush1.msra.mxu0 0.0
    %204 = vmatprep.subr.mxu0 0.0
    %205 = vmatpush1.msra.mxu0 0.0
    %206 = vmatprep.subr.mxu0 0.0
    %207 = vmatpush1.msra.mxu0 0.0
    %208 = vmatprep.subr.mxu0 0.0
    %209 = vmatpush1.msra.mxu0 0.0
    %210 = vmatprep.subr.mxu0 0.0
    %211 = vmatpush1.msra.mxu0 0.0
    %212 = vmatprep.subr.mxu0 0.0
    %213 = vmatpush1.msra.mxu0 0.0
    %214 = vmatprep.subr.mxu0 0.0
    %215 = vmatpush1.msra.mxu0 0.0
    %216 = vmatprep.subr.mxu0 0.0
    %217 = vmatpush1.msra.mxu0 0.0
    %218 = vmatprep.subr.mxu0 0.0
    %219 = vmatpush1.msra.mxu0 0.0
    %220 = vmatprep.subr.mxu0 0.0
    %221 = vmatpush1.msra.mxu0 0.0
    %222 = vmatprep.subr.mxu0 0.0
    %223 = vmatpush1.msra.mxu0 0.0
    %224 = vmatprep.subr.mxu0 0.0
    %225 = vmatpush1.msra.mxu0 0.0
    %226 = vmatprep.subr.mxu0 0.0
    %227 = vmatpush1.msra.mxu0 0.0
    %228 = vmatprep.subr.mxu0 0.0
    %229 = vmatpush1.msra.mxu0 0.0
    %230 = vmatprep.subr.mxu0 0.0
    %231 = vmatpush1.msra.mxu0 0.0
    %232 = vmatprep.subr.mxu0 0.0
    %233 = vmatpush1.msra.mxu0 0.0
    %234 = vmatprep.subr.mxu0 0.0
    %235 = vmatpush1.msra.mxu0 0.0
    %236 = vmatprep.subr.mxu0 0.0
    %237 = vmatpush1.msra.mxu0 0.0
    %238 = vmatprep.subr.mxu0 0.0
    %239 = vmatpush1.msra.mxu0 0.0
    %240 = vmatprep.subr.mxu0 0.0
    %241 = vmatpush1.msra.mxu0 0.0
    %242 = vmatprep.mubr.f32.mxu0 0.0
    %243 = vmatmul.mubr.f32.gmra.mrb[0].mxu0 %v105
    %v244 = vpop.f32.mrb[0].mxu0
    %v245 = vadd.f32 %v94, %v244
    %v246 = vpop.f32.mrb[0].mxu0
    %v247 = vadd.f32 %v98, %v246
    %248 = vdwg.mxu0
    %v249 = vmax.f32 %v174, 0.0
    %v250 = vmax.f32 %v176, 0.0
    %v251 = vmax.f32 %v245, 0.0
    %v252 = vmax.f32 %v247, 0.0
    %v253 = vld [vmem:[%s5] sm:$0xff]
    %v254 = vld [vmem:[%s5 + $0x8] sm:$0xff]
    %v257 = vcombine.high %v253, %v253
    %v258 = vcombine.high %v254, %v254
    %vm259 = vcmask 31744
    %v261 = vsel %vm259, %v72, 0
    %vm263 = vcmask 1043456
    %v264 = vsel %vm263, %v253, 0
    %v266 = vsel %vm263, %v257, 0
    %v268 = vsel %vm263, %v254, 0
    %v270 = vsel %vm263, %v258, 0
    %272 = vmatprep.subr.mxu0 %v266
    %273 = vmatpush1.msra.mxu0 %v264
    %274 = vmatprep.subr.mxu0 0.0
    %275 = vmatpush1.msra.mxu0 0.0
    %276 = vmatprep.subr.mxu0 0.0
    %277 = vmatpush1.msra.mxu0 0.0
    %278 = vmatprep.subr.mxu0 0.0
    %279 = vmatpush1.msra.mxu0 0.0
    %280 = vmatprep.subr.mxu0 0.0
    %281 = vmatpush1.msra.mxu0 0.0
    %282 = vmatprep.subr.mxu0 0.0
    %283 = vmatpush1.msra.mxu0 0.0
    %284 = vmatprep.subr.mxu0 0.0
    %285 = vmatpush1.msra.mxu0 0.0
    %286 = vmatprep.subr.mxu0 0.0
    %287 = vmatpush1.msra.mxu0 0.0
    %288 = vmatprep.subr.mxu0 0.0
    %289 = vmatpush1.msra.mxu0 0.0
    %290 = vmatprep.subr.mxu0 0.0
    %291 = vmatpush1.msra.mxu0 0.0
    %292 = vmatprep.subr.mxu0 0.0
    %293 = vmatpush1.msra.mxu0 0.0
    %294 = vmatprep.subr.mxu0 0.0
    %295 = vmatpush1.msra.mxu0 0.0
    %296 = vmatprep.subr.mxu0 0.0
    %297 = vmatpush1.msra.mxu0 0.0
    %298 = vmatprep.subr.mxu0 0.0
    %299 = vmatpush1.msra.mxu0 0.0
    %300 = vmatprep.subr.mxu0 0.0
    %301 = vmatpush1.msra.mxu0 0.0
    %302 = vmatprep.subr.mxu0 0.0
    %303 = vmatpush1.msra.mxu0 0.0
    %304 = vmatprep.subr.mxu0 0.0
    %305 = vmatpush1.msra.mxu0 0.0
    %306 = vmatprep.subr.mxu0 0.0
    %307 = vmatpush1.msra.mxu0 0.0
    %308 = vmatprep.subr.mxu0 0.0
    %309 = vmatpush1.msra.mxu0 0.0
    %310 = vmatprep.subr.mxu0 0.0
    %311 = vmatpush1.msra.mxu0 0.0
    %312 = vmatprep.subr.mxu0 0.0
    %313 = vmatpush1.msra.mxu0 0.0
    %314 = vmatprep.subr.mxu0 0.0
    %315 = vmatpush1.msra.mxu0 0.0
    %316 = vmatprep.subr.mxu0 0.0
    %317 = vmatpush1.msra.mxu0 0.0
    %318 = vmatprep.subr.mxu0 0.0
    %319 = vmatpush1.msra.mxu0 0.0
    %320 = vmatprep.subr.mxu0 0.0
    %321 = vmatpush1.msra.mxu0 0.0
    %322 = vmatprep.subr.mxu0 0.0
    %323 = vmatpush1.msra.mxu0 0.0
    %324 = vmatprep.subr.mxu0 0.0
    %325 = vmatpush1.msra.mxu0 0.0
    %326 = vmatprep.subr.mxu0 0.0
    %327 = vmatpush1.msra.mxu0 0.0
    %328 = vmatprep.subr.mxu0 0.0
    %329 = vmatpush1.msra.mxu0 0.0
    %330 = vmatprep.subr.mxu0 0.0
    %331 = vmatpush1.msra.mxu0 0.0
    %332 = vmatprep.subr.mxu0 0.0
    %333 = vmatpush1.msra.mxu0 0.0
    %334 = vmatprep.subr.mxu0 0.0
    %335 = vmatpush1.msra.mxu0 0.0
    %336 = vmatprep.mubr.f32.mxu0 0.0
    %337 = vmatmul.mubr.f32.gmra.mrb[0].mxu0 %v261
    %v338 = vpop.f32.mrb[0].mxu0
    %v339 = vadd.f32 0.0, %v338
    %v340 = vpop.f32.mrb[0].mxu0
    %v341 = vadd.f32 0.0, %v340
    %342 = vdwg.mxu0
    %343 = vmatprep.subr.mxu0 %v270
    %344 = vmatpush1.msra.mxu0 %v268
    %345 = vmatprep.subr.mxu0 0.0
    %346 = vmatpush1.msra.mxu0 0.0
    %347 = vmatprep.subr.mxu0 0.0
    %348 = vmatpush1.msra.mxu0 0.0
    %349 = vmatprep.subr.mxu0 0.0
    %350 = vmatpush1.msra.mxu0 0.0
    %351 = vmatprep.subr.mxu0 0.0
    %352 = vmatpush1.msra.mxu0 0.0
    %353 = vmatprep.subr.mxu0 0.0
    %354 = vmatpush1.msra.mxu0 0.0
    %355 = vmatprep.subr.mxu0 0.0
    %356 = vmatpush1.msra.mxu0 0.0
    %357 = vmatprep.subr.mxu0 0.0
    %358 = vmatpush1.msra.mxu0 0.0
    %359 = vmatprep.subr.mxu0 0.0
    %360 = vmatpush1.msra.mxu0 0.0
    %361 = vmatprep.subr.mxu0 0.0
    %362 = vmatpush1.msra.mxu0 0.0
    %363 = vmatprep.subr.mxu0 0.0
    %364 = vmatpush1.msra.mxu0 0.0
    %365 = vmatprep.subr.mxu0 0.0
    %366 = vmatpush1.msra.mxu0 0.0
    %367 = vmatprep.subr.mxu0 0.0
    %368 = vmatpush1.msra.mxu0 0.0
    %369 = vmatprep.subr.mxu0 0.0
    %370 = vmatpush1.msra.mxu0 0.0
    %371 = vmatprep.subr.mxu0 0.0
    %372 = vmatpush1.msra.mxu0 0.0
    %373 = vmatprep.subr.mxu0 0.0
    %374 = vmatpush1.msra.mxu0 0.0
    %375 = vmatprep.subr.mxu0 0.0
    %376 = vmatpush1.msra.mxu0 0.0
    %377 = vmatprep.subr.mxu0 0.0
    %378 = vmatpush1.msra.mxu0 0.0
    %379 = vmatprep.subr.mxu0 0.0
    %380 = vmatpush1.msra.mxu0 0.0
    %381 = vmatprep.subr.mxu0 0.0
    %382 = vmatpush1.msra.mxu0 0.0
    %383 = vmatprep.subr.mxu0 0.0
    %384 = vmatpush1.msra.mxu0 0.0
    %385 = vmatprep.subr.mxu0 0.0
    %386 = vmatpush1.msra.mxu0 0.0
    %387 = vmatprep.subr.mxu0 0.0
    %388 = vmatpush1.msra.mxu0 0.0
    %389 = vmatprep.subr.mxu0 0.0
    %390 = vmatpush1.msra.mxu0 0.0
    %391 = vmatprep.subr.mxu0 0.0
    %392 = vmatpush1.msra.mxu0 0.0
    %393 = vmatprep.subr.mxu0 0.0
    %394 = vmatpush1.msra.mxu0 0.0
    %395 = vmatprep.subr.mxu0 0.0
    %396 = vmatpush1.msra.mxu0 0.0
    %397 = vmatprep.subr.mxu0 0.0
    %398 = vmatpush1.msra.mxu0 0.0
    %399 = vmatprep.subr.mxu0 0.0
    %400 = vmatpush1.msra.mxu0 0.0
    %401 = vmatprep.subr.mxu0 0.0
    %402 = vmatpush1.msra.mxu0 0.0
    %403 = vmatprep.subr.mxu0 0.0
    %404 = vmatpush1.msra.mxu0 0.0
    %405 = vmatprep.subr.mxu0 0.0
    %406 = vmatpush1.msra.mxu0 0.0
    %407 = vmatprep.mubr.f32.mxu0 0.0
    %408 = vmatmul.mubr.f32.gmra.mrb[0].mxu0 %v261
    %v409 = vpop.f32.mrb[0].mxu0
    %v410 = vadd.f32 0.0, %v409
    %v411 = vpop.f32.mrb[0].mxu0
    %v412 = vadd.f32 0.0, %v411
    %413 = vdwg.mxu0
    %v414 = vld [vmem:[#allocation4] sm:$0xff]
    %v415 = vld [vmem:[#allocation4 + $0x8] sm:$0xff]
    %v416 = vld [vmem:[#allocation4 + $0x10] sm:$0xff]
    %v417 = vld [vmem:[#allocation4 + $0x18] sm:$0xff]
    %v418 = vld [vmem:[#allocation4 + $0x20] sm:$0xff]
    %v419 = vld [vmem:[#allocation4 + $0x28] sm:$0xff]
    %v420 = vld [vmem:[#allocation4 + $0x30] sm:$0xff]
    %v421 = vld [vmem:[#allocation4 + $0x38] sm:$0xff]
    %v422 = vld [vmem:[#allocation4 + $0x40] sm:$0xff]
    %v423 = vld [vmem:[#allocation4 + $0x48] sm:$0xff]
    %v424 = vld [vmem:[#allocation4 + $0x50] sm:$0xff]
    %v425 = vld [vmem:[#allocation4 + $0x58] sm:$0xff]
    %v426 = vld [vmem:[#allocation4 + $0x60] sm:$0xff]
    %v427 = vld [vmem:[#allocation4 + $0x68] sm:$0xff]
    %v428 = vld [vmem:[#allocation4 + $0x70] sm:$0xff]
    %v429 = vld [vmem:[#allocation4 + $0x78] sm:$0xff]
    %v430 = vld [vmem:[#allocation4 + $0x80] sm:$0xff]
    %v431 = vld [vmem:[#allocation4 + $0x88] sm:$0xff]
    %v432 = vld [vmem:[#allocation4 + $0x90] sm:$0xff]
    %v433 = vld [vmem:[#allocation4 + $0x98] sm:$0xff]
    %v434 = vld [vmem:[#allocation4 + $0xa0] sm:$0xff]
    %v435 = vld [vmem:[#allocation4 + $0xa8] sm:$0xff]
    %v436 = vld [vmem:[#allocation4 + $0xb0] sm:$0xff]
    %v437 = vld [vmem:[#allocation4 + $0xb8] sm:$0xff]
    %v438 = vld [vmem:[#allocation4 + $0xc0] sm:$0xff]
    %v439 = vld [vmem:[#allocation4 + $0xc8] sm:$0xff]
    %v440 = vld [vmem:[#allocation4 + $0xd0] sm:$0xff]
    %v441 = vld [vmem:[#allocation4 + $0xd8] sm:$0xff]
    %v442 = vld [vmem:[#allocation4 + $0xe0] sm:$0xff]
    %v443 = vld [vmem:[#allocation4 + $0xe8] sm:$0xff]
    %v444 = vld [vmem:[#allocation4 + $0xf0] sm:$0xff]
    %v445 = vld [vmem:[#allocation4 + $0xf8] sm:$0xff]
    %v446 = vld [vmem:[#allocation4 + $0x100] sm:$0xff]
    %v447 = vld [vmem:[#allocation4 + $0x108] sm:$0xff]
    %v448 = vld [vmem:[#allocation4 + $0x110] sm:$0xff]
    %v449 = vld [vmem:[#allocation4 + $0x118] sm:$0xff]
    %v450 = vld [vmem:[#allocation4 + $0x120] sm:$0xff]
    %v451 = vld [vmem:[#allocation4 + $0x128] sm:$0xff]
    %v452 = vld [vmem:[#allocation4 + $0x130] sm:$0xff]
    %v453 = vld [vmem:[#allocation4 + $0x138] sm:$0xff]
    %v454 = vld [vmem:[#allocation4 + $0x140] sm:$0xff]
    %v455 = vld [vmem:[#allocation4 + $0x148] sm:$0xff]
    %v456 = vld [vmem:[#allocation4 + $0x150] sm:$0xff]
    %v457 = vld [vmem:[#allocation4 + $0x158] sm:$0xff]
    %v458 = vld [vmem:[#allocation4 + $0x160] sm:$0xff]
    %v459 = vld [vmem:[#allocation4 + $0x168] sm:$0xff]
    %v460 = vld [vmem:[#allocation4 + $0x170] sm:$0xff]
    %v461 = vld [vmem:[#allocation4 + $0x178] sm:$0xff]
    %v462 = vld [vmem:[#allocation4 + $0x180] sm:$0xff]
    %v463 = vld [vmem:[#allocation4 + $0x188] sm:$0xff]
    %v464 = vld [vmem:[#allocation4 + $0x190] sm:$0xff]
    %v465 = vld [vmem:[#allocation4 + $0x198] sm:$0xff]
    %v466 = vld [vmem:[#allocation4 + $0x1a0] sm:$0xff]
    %v467 = vld [vmem:[#allocation4 + $0x1a8] sm:$0xff]
    %v468 = vld [vmem:[#allocation4 + $0x1b0] sm:$0xff]
    %v469 = vld [vmem:[#allocation4 + $0x1b8] sm:$0xff]
    %v470 = vld [vmem:[#allocation4 + $0x1c0] sm:$0xff]
    %v471 = vld [vmem:[#allocation4 + $0x1c8] sm:$0xff]
    %v472 = vld [vmem:[#allocation4 + $0x1d0] sm:$0xff]
    %v473 = vld [vmem:[#allocation4 + $0x1d8] sm:$0xff]
    %v474 = vld [vmem:[#allocation4 + $0x1e0] sm:$0xff]
    %v475 = vld [vmem:[#allocation4 + $0x1e8] sm:$0xff]
    %v476 = vld [vmem:[#allocation4 + $0x1f0] sm:$0xff]
    %v477 = vld [vmem:[#allocation4 + $0x1f8] sm:$0xff]
    %478 = vmatprep.subr.mxu0 %v415
    %479 = vmatpush1.msra.mxu0 %v414
    %480 = vmatprep.subr.mxu0 %v417
    %481 = vmatpush1.msra.mxu0 %v416
    %482 = vmatprep.subr.mxu0 %v419
    %483 = vmatpush1.msra.mxu0 %v418
    %484 = vmatprep.subr.mxu0 %v421
    %485 = vmatpush1.msra.mxu0 %v420
    %486 = vmatprep.subr.mxu0 %v423
    %487 = vmatpush1.msra.mxu0 %v422
    %488 = vmatprep.subr.mxu0 %v425
    %489 = vmatpush1.msra.mxu0 %v424
    %490 = vmatprep.subr.mxu0 %v427
    %491 = vmatpush1.msra.mxu0 %v426
    %492 = vmatprep.subr.mxu0 %v429
    %493 = vmatpush1.msra.mxu0 %v428
    %494 = vmatprep.subr.mxu0 %v431
    %495 = vmatpush1.msra.mxu0 %v430
    %496 = vmatprep.subr.mxu0 %v433
    %497 = vmatpush1.msra.mxu0 %v432
    %498 = vmatprep.subr.mxu0 %v435
    %499 = vmatpush1.msra.mxu0 %v434
    %500 = vmatprep.subr.mxu0 %v437
    %501 = vmatpush1.msra.mxu0 %v436
    %502 = vmatprep.subr.mxu0 %v439
    %503 = vmatpush1.msra.mxu0 %v438
    %504 = vmatprep.subr.mxu0 %v441
    %505 = vmatpush1.msra.mxu0 %v440
    %506 = vmatprep.subr.mxu0 %v443
    %507 = vmatpush1.msra.mxu0 %v442
    %508 = vmatprep.subr.mxu0 %v445
    %509 = vmatpush1.msra.mxu0 %v444
    %510 = vmatprep.subr.mxu0 %v447
    %511 = vmatpush1.msra.mxu0 %v446
    %512 = vmatprep.subr.mxu0 %v449
    %513 = vmatpush1.msra.mxu0 %v448
    %514 = vmatprep.subr.mxu0 %v451
    %515 = vmatpush1.msra.mxu0 %v450
    %516 = vmatprep.subr.mxu0 %v453
    %517 = vmatpush1.msra.mxu0 %v452
    %518 = vmatprep.subr.mxu0 %v455
    %519 = vmatpush1.msra.mxu0 %v454
    %520 = vmatprep.subr.mxu0 %v457
    %521 = vmatpush1.msra.mxu0 %v456
    %522 = vmatprep.subr.mxu0 %v459
    %523 = vmatpush1.msra.mxu0 %v458
    %524 = vmatprep.subr.mxu0 %v461
    %525 = vmatpush1.msra.mxu0 %v460
    %526 = vmatprep.subr.mxu0 %v463
    %527 = vmatpush1.msra.mxu0 %v462
    %528 = vmatprep.subr.mxu0 %v465
    %529 = vmatpush1.msra.mxu0 %v464
    %530 = vmatprep.subr.mxu0 %v467
    %531 = vmatpush1.msra.mxu0 %v466
    %532 = vmatprep.subr.mxu0 %v469
    %533 = vmatpush1.msra.mxu0 %v468
    %534 = vmatprep.subr.mxu0 %v471
    %535 = vmatpush1.msra.mxu0 %v470
    %536 = vmatprep.subr.mxu0 %v473
    %537 = vmatpush1.msra.mxu0 %v472
    %538 = vmatprep.subr.mxu0 %v475
    %539 = vmatpush1.msra.mxu0 %v474
    %540 = vmatprep.subr.mxu0 %v477
    %541 = vmatpush1.msra.mxu0 %v476
    %542 = vmatprep.mubr.f32.mxu0 %v250
    %543 = vmatmul.mubr.f32.gmra.mrb[0].mxu0 %v249
    %v544 = vpop.f32.mrb[0].mxu0
    %v545 = vadd.f32 %v339, %v544
    %v546 = vpop.f32.mrb[0].mxu0
    %v547 = vadd.f32 %v341, %v546
    %548 = vdwg.mxu0
    %v549 = vld [vmem:[#allocation6] sm:$0x3]
    %v551 = vlaneseq
    %v552 = vshrl.u32 %v551, 7
    %v553 = vsub.s32 0, %v552
    %v554 = vrot.slane %v549, %v553
    %v555 = vlaneseq
    %v556 = vshrl.u32 %v555, 7
    %v557 = vsub.s32 1, %v556
    %v558 = vrot.slane %v549, %v557
    %v561 = vadd.f32 %v545, %v554
    %v562 = vadd.f32 %v547, %v558
    %v563 = vmax.f32 %v561, 0.0
    %v564 = vmax.f32 %v562, 0.0
    %v565 = vld [vmem:[%s7] ss:$2 sm:$0x3]
    %v567 = vlaneseq
    %v568 = vshrl.u32 %v567, 7
    %v569 = vsub.s32 0, %v568
    %v570 = vrot.slane %v565, %v569
    %v571 = vlaneseq
    %v572 = vshrl.u32 %v571, 7
    %v573 = vsub.s32 1, %v572
    %v574 = vrot.slane %v565, %v573
    %v577 = vmul.f32 %v563, %v570
    %v578 = vmul.f32 %v564, %v574
    %v579 = vadd.f32 %v577, %v578
    %580 = vadd.xlane.f32.xlu0 %v579
    %v581 = vpop.xlane.xlu0 %580
    %v582 = vld [vmem:[%s8] sm:$0x1]
    %v584 = vlaneseq
    %v585 = vshrl.u32 %v584, 7
    %v586 = vsub.s32 0, %v585
    %v587 = vrot.slane %v582, %v586
    %v589 = vadd.f32 %v581, %v587
    %vm590 = vcmask 7168
    %591 = vst.msk [vmem:[%s9] sm:$0xff] %vm590, %v589
    %s592 = scalar_lea.vmem [#allocation4], 512
    %v593 = vld [vmem:[%s592] sm:$0xff]
    %v594 = vld [vmem:[%s592 + $0x8] sm:$0xff]
    %v595 = vld [vmem:[%s592 + $0x10] sm:$0xff]
    %v596 = vld [vmem:[%s592 + $0x18] sm:$0xff]
    %v597 = vld [vmem:[%s592 + $0x20] sm:$0xff]
    %v598 = vld [vmem:[%s592 + $0x28] sm:$0xff]
    %v599 = vld [vmem:[%s592 + $0x30] sm:$0xff]
    %v600 = vld [vmem:[%s592 + $0x38] sm:$0xff]
    %v601 = vld [vmem:[%s592 + $0x40] sm:$0xff]
    %v602 = vld [vmem:[%s592 + $0x48] sm:$0xff]
    %v603 = vld [vmem:[%s592 + $0x50] sm:$0xff]
    %v604 = vld [vmem:[%s592 + $0x58] sm:$0xff]
    %v605 = vld [vmem:[%s592 + $0x60] sm:$0xff]
    %v606 = vld [vmem:[%s592 + $0x68] sm:$0xff]
    %v607 = vld [vmem:[%s592 + $0x70] sm:$0xff]
    %v608 = vld [vmem:[%s592 + $0x78] sm:$0xff]
    %v609 = vld [vmem:[%s592 + $0x80] sm:$0xff]
    %v610 = vld [vmem:[%s592 + $0x88] sm:$0xff]
    %v611 = vld [vmem:[%s592 + $0x90] sm:$0xff]
    %v612 = vld [vmem:[%s592 + $0x98] sm:$0xff]
    %v613 = vld [vmem:[%s592 + $0xa0] sm:$0xff]
    %v614 = vld [vmem:[%s592 + $0xa8] sm:$0xff]
    %v615 = vld [vmem:[%s592 + $0xb0] sm:$0xff]
    %v616 = vld [vmem:[%s592 + $0xb8] sm:$0xff]
    %v617 = vld [vmem:[%s592 + $0xc0] sm:$0xff]
    %v618 = vld [vmem:[%s592 + $0xc8] sm:$0xff]
    %v619 = vld [vmem:[%s592 + $0xd0] sm:$0xff]
    %v620 = vld [vmem:[%s592 + $0xd8] sm:$0xff]
    %v621 = vld [vmem:[%s592 + $0xe0] sm:$0xff]
    %v622 = vld [vmem:[%s592 + $0xe8] sm:$0xff]
    %v623 = vld [vmem:[%s592 + $0xf0] sm:$0xff]
    %v624 = vld [vmem:[%s592 + $0xf8] sm:$0xff]
    %v625 = vld [vmem:[%s592 + $0x100] sm:$0xff]
    %v626 = vld [vmem:[%s592 + $0x108] sm:$0xff]
    %v627 = vld [vmem:[%s592 + $0x110] sm:$0xff]
    %v628 = vld [vmem:[%s592 + $0x118] sm:$0xff]
    %v629 = vld [vmem:[%s592 + $0x120] sm:$0xff]
    %v630 = vld [vmem:[%s592 + $0x128] sm:$0xff]
    %v631 = vld [vmem:[%s592 + $0x130] sm:$0xff]
    %v632 = vld [vmem:[%s592 + $0x138] sm:$0xff]
    %v633 = vld [vmem:[%s592 + $0x140] sm:$0xff]
    %v634 = vld [vmem:[%s592 + $0x148] sm:$0xff]
    %v635 = vld [vmem:[%s592 + $0x150] sm:$0xff]
    %v636 = vld [vmem:[%s592 + $0x158] sm:$0xff]
    %v637 = vld [vmem:[%s592 + $0x160] sm:$0xff]
    %v638 = vld [vmem:[%s592 + $0x168] sm:$0xff]
    %v639 = vld [vmem:[%s592 + $0x170] sm:$0xff]
    %v640 = vld [vmem:[%s592 + $0x178] sm:$0xff]
    %v641 = vld [vmem:[%s592 + $0x180] sm:$0xff]
    %v642 = vld [vmem:[%s592 + $0x188] sm:$0xff]
    %v643 = vld [vmem:[%s592 + $0x190] sm:$0xff]
    %v644 = vld [vmem:[%s592 + $0x198] sm:$0xff]
    %v645 = vld [vmem:[%s592 + $0x1a0] sm:$0xff]
    %v646 = vld [vmem:[%s592 + $0x1a8] sm:$0xff]
    %v647 = vld [vmem:[%s592 + $0x1b0] sm:$0xff]
    %v648 = vld [vmem:[%s592 + $0x1b8] sm:$0xff]
    %v649 = vld [vmem:[%s592 + $0x1c0] sm:$0xff]
    %v650 = vld [vmem:[%s592 + $0x1c8] sm:$0xff]
    %v651 = vld [vmem:[%s592 + $0x1d0] sm:$0xff]
    %v652 = vld [vmem:[%s592 + $0x1d8] sm:$0xff]
    %v653 = vld [vmem:[%s592 + $0x1e0] sm:$0xff]
    %v654 = vld [vmem:[%s592 + $0x1e8] sm:$0xff]
    %v655 = vld [vmem:[%s592 + $0x1f0] sm:$0xff]
    %v656 = vld [vmem:[%s592 + $0x1f8] sm:$0xff]
    %657 = vmatprep.subr.mxu0 %v594
    %658 = vmatpush1.msra.mxu0 %v593
    %659 = vmatprep.subr.mxu0 %v596
    %660 = vmatpush1.msra.mxu0 %v595
    %661 = vmatprep.subr.mxu0 %v598
    %662 = vmatpush1.msra.mxu0 %v597
    %663 = vmatprep.subr.mxu0 %v600
    %664 = vmatpush1.msra.mxu0 %v599
    %665 = vmatprep.subr.mxu0 %v602
    %666 = vmatpush1.msra.mxu0 %v601
    %667 = vmatprep.subr.mxu0 %v604
    %668 = vmatpush1.msra.mxu0 %v603
    %669 = vmatprep.subr.mxu0 %v606
    %670 = vmatpush1.msra.mxu0 %v605
    %671 = vmatprep.subr.mxu0 %v608
    %672 = vmatpush1.msra.mxu0 %v607
    %673 = vmatprep.subr.mxu0 %v610
    %674 = vmatpush1.msra.mxu0 %v609
    %675 = vmatprep.subr.mxu0 %v612
    %676 = vmatpush1.msra.mxu0 %v611
    %677 = vmatprep.subr.mxu0 %v614
    %678 = vmatpush1.msra.mxu0 %v613
    %679 = vmatprep.subr.mxu0 %v616
    %680 = vmatpush1.msra.mxu0 %v615
    %681 = vmatprep.subr.mxu0 %v618
    %682 = vmatpush1.msra.mxu0 %v617
    %683 = vmatprep.subr.mxu0 %v620
    %684 = vmatpush1.msra.mxu0 %v619
    %685 = vmatprep.subr.mxu0 %v622
    %686 = vmatpush1.msra.mxu0 %v621
    %687 = vmatprep.subr.mxu0 %v624
    %688 = vmatpush1.msra.mxu0 %v623
    %689 = vmatprep.subr.mxu0 %v626
    %690 = vmatpush1.msra.mxu0 %v625
    %691 = vmatprep.subr.mxu0 %v628
    %692 = vmatpush1.msra.mxu0 %v627
    %693 = vmatprep.subr.mxu0 %v630
    %694 = vmatpush1.msra.mxu0 %v629
    %695 = vmatprep.subr.mxu0 %v632
    %696 = vmatpush1.msra.mxu0 %v631
    %697 = vmatprep.subr.mxu0 %v634
    %698 = vmatpush1.msra.mxu0 %v633
    %699 = vmatprep.subr.mxu0 %v636
    %700 = vmatpush1.msra.mxu0 %v635
    %701 = vmatprep.subr.mxu0 %v638
    %702 = vmatpush1.msra.mxu0 %v637
    %703 = vmatprep.subr.mxu0 %v640
    %704 = vmatpush1.msra.mxu0 %v639
    %705 = vmatprep.subr.mxu0 %v642
    %706 = vmatpush1.msra.mxu0 %v641
    %707 = vmatprep.subr.mxu0 %v644
    %708 = vmatpush1.msra.mxu0 %v643
    %709 = vmatprep.subr.mxu0 %v646
    %710 = vmatpush1.msra.mxu0 %v645
    %711 = vmatprep.subr.mxu0 %v648
    %712 = vmatpush1.msra.mxu0 %v647
    %713 = vmatprep.subr.mxu0 %v650
    %714 = vmatpush1.msra.mxu0 %v649
    %715 = vmatprep.subr.mxu0 %v652
    %716 = vmatpush1.msra.mxu0 %v651
    %717 = vmatprep.subr.mxu0 %v654
    %718 = vmatpush1.msra.mxu0 %v653
    %719 = vmatprep.subr.mxu0 %v656
    %720 = vmatpush1.msra.mxu0 %v655
    %721 = vmatprep.mubr.f32.mxu0 %v252
    %722 = vmatmul.mubr.f32.gmra.mrb[0].mxu0 %v251
    %v723 = vpop.f32.mrb[0].mxu0
    %v724 = vadd.f32 %v410, %v723
    %v725 = vpop.f32.mrb[0].mxu0
    %v726 = vadd.f32 %v412, %v725
    %727 = vdwg.mxu0
    %v728 = vld [vmem:[#allocation6 + $0x2] sm:$0x3]
    %v730 = vlaneseq
    %v731 = vshrl.u32 %v730, 7
    %v732 = vsub.s32 0, %v731
    %v733 = vrot.slane %v728, %v732
    %v734 = vlaneseq
    %v735 = vshrl.u32 %v734, 7
    %v736 = vsub.s32 1, %v735
    %v737 = vrot.slane %v728, %v736
    %v740 = vadd.f32 %v724, %v733
    %v741 = vadd.f32 %v726, %v737
    %v742 = vmax.f32 %v740, 0.0
    %v743 = vmax.f32 %v741, 0.0
    %s744 = scalar_lea.vmem %s7, 1
    %v745 = vld [vmem:[%s744] ss:$2 sm:$0x3]
    %v747 = vlaneseq
    %v748 = vshrl.u32 %v747, 7
    %v749 = vsub.s32 0, %v748
    %v750 = vrot.slane %v745, %v749
    %v751 = vlaneseq
    %v752 = vshrl.u32 %v751, 7
    %v753 = vsub.s32 1, %v752
    %v754 = vrot.slane %v745, %v753
    %v757 = vmul.f32 %v742, %v750
    %v758 = vmul.f32 %v743, %v754
    %v759 = vadd.f32 %v757, %v758
    %760 = vadd.xlane.f32.xlu0 %v759
    %v761 = vpop.xlane.xlu0 %760
    %v762 = vld [vmem:[%s8] sm:$0x1]
    %v764 = vlaneseq
    %v765 = vshrl.u32 %v764, 7
    %v766 = vsub.s32 0, %v765
    %v767 = vrot.slane %v762, %v766
    %v769 = vadd.f32 %v761, %v767
    %vm770 = vcmask 15368
    %771 = vst.msk [vmem:[%s9] sm:$0xff] %vm770, %v769
    // Predicated region
    $region50: #{critic_forward.1} parent=1 // pred_check
      _
    $region51: #{critic_forward.1} parent=1 // pred_check_branch
      %773 = sbr.rel (0) target = $region53
    $region52: #{critic_forward.1} parent=1 // pred_region
      _
    $region53: #{critic_forward.1} parent=1 // pred_fallthru
      _
    // Predicated region
    $region54: #{critic_forward.1} parent=1 // pred_check
      _
    $region55: #{critic_forward.1} parent=1 // pred_check_branch
      %775 = sbr.rel (0) target = $region57
    $region56: #{critic_forward.1} parent=1 // pred_region
      _
    $region57: #{critic_forward.1} parent=1 // pred_fallthru
      _
    %776 = vsyncpa [#allocation3], 1
    %777 = vsyncpa [#allocation5], 1

</llo_original>
